<compile_context>
chip_gen: v5e
topology: v5e:2x2
jax: 0.10.0
libtpu: 0.0.40
codegen_flags: <defaults>
</compile_context>

<pallas_src>
import jax
import jax.numpy as jnp
from jax.experimental import pallas as pl
from jax.experimental.pallas import tpu as pltpu


def _round_up(a: int, m: int) -> int:
    return ((a + m - 1) // m) * m


def _cdiv(a: int, m: int) -> int:
    return (a + m - 1) // m


def _make_critic_kernel(chunk: int, n_chunks: int):
    """Build a kernel specialized for a (static) chunk size / chunk count."""

    def kernel(x_ref, w1_ref, b1_ref, w2_ref, b2_ref, o_ref):
        # x_ref : (tb, F)  batch tile, native (batch, feature) layout
        # w1_ref: (H, F)   fc1 weight (transposed), resident across grid steps
        # b1_ref: (H, 1)   fc1 bias column (broadcasts across lanes)
        # w2_ref: (H, 1)   fc2 weight column (broadcasts across lanes)
        # b2_ref: (1, 1)   fc2 bias scalar in SMEM
        # o_ref : (1, tb)  lane-dense output tile (batch along lanes)
        w1 = w1_ref[...]
        b1 = b1_ref[...]
        w2 = w2_ref[...]
        b2 = b2_ref[0, 0]

        # Static (unrolled) loop over batch sub-chunks: keeps the (H, chunk)
        # intermediate in vregs and uses only static ref slices.
        for c in range(n_chunks):
            lo = c * chunk
            xc = x_ref[lo:lo + chunk, :]                       # (chunk, F)
            # Contract the F axis of both operands: (H,F) . (chunk,F)^T -> (H, chunk).
            # Batch ends up on the lane axis without any host-side transpose.
            h = jax.lax.dot_general(
                w1, xc, (((1,), (1,)), ((), ())),
                preferred_element_type=jnp.float32)            # (H, chunk)
            h = jnp.maximum(h + b1, 0.0)                       # ReLU + bias
            # fc2 as broadcast-multiply + sublane reduction (no M=1 matmul).
            v = jnp.sum(h * w2, axis=0, keepdims=True)         # (1, chunk)
            o_ref[:, lo:lo + chunk] = v + b2

    return kernel


def critic_forward(x, w1, b1, w2, b2, *, tile_b: int = 16384, chunk_b: int = 512):
    """x: (B, F) f32; w1: (F, 32); b1: (32,); w2: (32, 1); b2: (1,) -> (B, 1)."""
    B, F = x.shape
    H = w1.shape[1]

    # Tiny, resident operands (layout plumbing only; no pass over x).
    w1t = jnp.transpose(w1)        # (H, F)
    b1c = b1.reshape(H, 1)         # (H, 1) column for lane broadcast
    w2c = w2.reshape(H, 1)         # (H, 1) column for lane broadcast
    b2s = b2.reshape(1, 1)         # (1, 1) scalar for SMEM

    # Tile / chunk selection.
    if B <= chunk_b:
        # Small batch (the A2C learn() path): one full-array block, one chunk.
        tb, chunk, grid = B, B, (1,)
    else:
        chunk = chunk_b
        # At least 2 grid blocks for large B (both v7x TensorCores get work),
        # capped at tile_b, rounded to a multiple of the chunk size.
        tb = min(tile_b, _round_up(_cdiv(B, 2), chunk))
        tb = max(chunk, _round_up(tb, chunk))
        grid = (_cdiv(B, tb),)
    n_chunks = tb // chunk

    kernel = _make_critic_kernel(chunk, n_chunks)

    out_t = pl.pallas_call(
        kernel,
        out_shape=jax.ShapeDtypeStruct((1, B), jnp.float32),
        grid=grid,
        in_specs=[
            pl.BlockSpec((tb, F), lambda i: (i, 0)),     # x tile, native layout
            pl.BlockSpec((H, F), lambda i: (0, 0)),      # w1^T resident
            pl.BlockSpec((H, 1), lambda i: (0, 0)),      # b1 column resident
            pl.BlockSpec((H, 1), lambda i: (0, 0)),      # w2 column resident
            pl.BlockSpec(memory_space=pltpu.SMEM),       # b2 scalar in SMEM
        ],
        out_specs=pl.BlockSpec((1, tb), lambda i: (0, i)),
        compiler_params=pltpu.CompilerParams(
            dimension_semantics=("parallel",),           # megacore on v7x
            vmem_limit_bytes=32 * 1024 * 1024,           # safe on v5e/v6e/v7x
        ),
    )(x, w1t, b1c, w2c, b2s)

    # (1, B) -> (B, 1): a reshape (same linear order), not a transpose.
    return out_t.reshape(B, 1)


def init_critic_params(key, n_features, hidden=32):
    """Deterministic init matching torch.nn.Linear defaults:
    U(-1/sqrt(fan_in), 1/sqrt(fan_in)) for both weight and bias."""
    k1, k2, k3, k4 = jax.random.split(key, 4)
    bound1 = 1.0 / jnp.sqrt(jnp.float32(n_features))
    bound2 = 1.0 / jnp.sqrt(jnp.float32(hidden))
    # stored as (in, out) — transpose of torch's (out, in)
    w1 = jax.random.uniform(k1, (n_features, hidden), jnp.float32, -bound1, bound1)
    b1 = jax.random.uniform(k2, (hidden,), jnp.float32, -bound1, bound1)
    w2 = jax.random.uniform(k3, (hidden, 1), jnp.float32, -bound2, bound2)
    b2 = jax.random.uniform(k4, (1,), jnp.float32, -bound2, bound2)
    return w1, b1, w2, b2


if __name__ == "__main__":
    key = jax.random.PRNGKey(0)
    k_x, k_p, k_big, k_rag = jax.random.split(key, 4)

    n_features = 4   # CartPole observation dim
    w1, b1, w2, b2 = init_critic_params(k_p, n_features)

    def ref_fn(xx):
        return jnp.maximum(xx @ w1 + b1, 0.0) @ w2 + b2

    # 1) Tiny batch (as in the A2C learn() path): single-block, single-chunk.
    x = jax.random.normal(k_x, (2, n_features), dtype=jnp.float32)
    out = jax.block_until_ready(critic_forward(x, w1, b1, w2, b2))
    assert out.shape == (2, 1)
    assert jnp.allclose(out, ref_fn(x), atol=1e-5, rtol=1e-5)

    # 2) Larger batch exercising the multi-block, multi-chunk pipelined path.
    xb = jax.random.normal(k_big, (2048, n_features), dtype=jnp.float32)
    outb = jax.block_until_ready(critic_forward(xb, w1, b1, w2, b2))
    assert outb.shape == (2048, 1)
    assert jnp.allclose(outb, ref_fn(xb), atol=1e-5, rtol=1e-5)

    # 3) Ragged last block: B not a multiple of the batch tile.
    xr = jax.random.normal(k_rag, (500, n_features), dtype=jnp.float32)
    outr = jax.block_until_ready(
        critic_forward(xr, w1, b1, w2, b2, tile_b=128, chunk_b=128))
    assert outr.shape == (500, 1)
    assert jnp.allclose(outr, ref_fn(xr), atol=1e-5, rtol=1e-5)

    print("KERNEL_OK")
</pallas_src>

<mosaic_0001>
module attributes {stable_mosaic.version = 11 : i64} {
  func.func @kernel(%arg0: i32, %arg1: memref<2x4xf32, #tpu.memory_space<vmem>>, %arg2: memref<32x4xf32, #tpu.memory_space<vmem>>, %arg3: memref<32x1xf32, #tpu.memory_space<vmem>>, %arg4: memref<32x1xf32, #tpu.memory_space<vmem>>, %arg5: memref<1x1xf32, #tpu.memory_space<smem>>, %arg6: memref<1x2xf32, #tpu.memory_space<vmem>>) attributes {dimension_semantics = [#tpu.dimension_semantics<parallel>], iteration_bounds = array<i64: 1>, scalar_prefetch = 0 : i64, scratch_operands = 0 : i64, tpu.core_type = #tpu.core_type<tc>, window_params = [{transform_indices = @transform_0, window_bounds = array<i64: 2, 4>}, {pipeline_mode = #tpu.pipeline_mode<synchronous>, transform_indices = @transform_1, window_bounds = array<i64: 32, 4>}, {pipeline_mode = #tpu.pipeline_mode<synchronous>, transform_indices = @transform_2, window_bounds = array<i64: 32, 1>}, {pipeline_mode = #tpu.pipeline_mode<synchronous>, transform_indices = @transform_3, window_bounds = array<i64: 32, 1>}, {transform_indices = @transform_4, window_bounds = array<i64: 1, 1>}, {transform_indices = @transform_5, window_bounds = array<i64: 1, 2>}]} {
    %c0 = arith.constant 0 : index
    %c0_0 = arith.constant 0 : index
    %0 = vector.load %arg2[%c0, %c0_0] : memref<32x4xf32, #tpu.memory_space<vmem>>, vector<32x4xf32>
    %c0_1 = arith.constant 0 : index
    %c0_2 = arith.constant 0 : index
    %1 = vector.load %arg3[%c0_1, %c0_2] : memref<32x1xf32, #tpu.memory_space<vmem>>, vector<32x1xf32>
    %c0_3 = arith.constant 0 : index
    %c0_4 = arith.constant 0 : index
    %2 = vector.load %arg4[%c0_3, %c0_4] : memref<32x1xf32, #tpu.memory_space<vmem>>, vector<32x1xf32>
    %c0_5 = arith.constant 0 : index
    %c0_6 = arith.constant 0 : index
    %3 = memref.load %arg5[%c0_5, %c0_6] : memref<1x1xf32, #tpu.memory_space<smem>>
    %c0_7 = arith.constant 0 : index
    %c0_8 = arith.constant 0 : index
    %4 = vector.load %arg1[%c0_7, %c0_8] : memref<2x4xf32, #tpu.memory_space<vmem>>, vector<2x4xf32>
    %cst = arith.constant dense<0.000000e+00> : vector<32x2xf32>
    %5 = tpu.matmul %0, %4, %cst {dimension_numbers = #tpu.dot_dimension_numbers<[1], [1], [0], [0], [0, 0, 1, 0], [], []>} : vector<32x4xf32>, vector<2x4xf32>, vector<32x2xf32> -> vector<32x2xf32>
    %6 = vector.broadcast %1 : vector<32x1xf32> to vector<32x2xf32>
    %7 = arith.addf %5, %6 : vector<32x2xf32>
    %cst_9 = arith.constant 0.000000e+00 : f32
    %8 = vector.broadcast %cst_9 : f32 to vector<32x2xf32>
    %9 = arith.maximumf %7, %8 : vector<32x2xf32>
    %10 = vector.broadcast %2 : vector<32x1xf32> to vector<32x2xf32>
    %11 = arith.mulf %9, %10 : vector<32x2xf32>
    %cst_10 = arith.constant dense<0.000000e+00> : vector<2xf32>
    %12 = vector.multi_reduction <add>, %11, %cst_10 [0] : vector<32x2xf32> to vector<2xf32>
    %13 = vector.shape_cast %12 : vector<2xf32> to vector<1x2xf32>
    %14 = vector.broadcast %3 : f32 to vector<1x2xf32>
    %15 = arith.addf %13, %14 : vector<1x2xf32>
    %c0_11 = arith.constant 0 : index
    %c0_12 = arith.constant 0 : index
    %16 = vector.load %arg6[%c0_11, %c0_12] : memref<1x2xf32, #tpu.memory_space<vmem>>, vector<1x2xf32>
    tpu.vector_store %arg6[%c0_11, %c0_12], %15 {strides = array<i32>} : memref<1x2xf32, #tpu.memory_space<vmem>>, vector<1x2xf32>,
    return
  }
  func.func @transform_0(%arg0: i32) -> (i32, i32) {
    %c0_i32 = arith.constant 0 : i32
    %c0_i32_0 = arith.constant 0 : i32
    return %arg0, %c0_i32 : i32, i32
  }
  func.func @transform_1(%arg0: i32) -> (i32, i32) {
    %c0_i32 = arith.constant 0 : i32
    %c0_i32_0 = arith.constant 0 : i32
    %c0_i32_1 = arith.constant 0 : i32
    return %c0_i32, %c0_i32_0 : i32, i32
  }
  func.func @transform_2(%arg0: i32) -> (i32, i32) {
    %c0_i32 = arith.constant 0 : i32
    %c0_i32_0 = arith.constant 0 : i32
    %c0_i32_1 = arith.constant 0 : i32
    return %c0_i32, %c0_i32_0 : i32, i32
  }
  func.func @transform_3(%arg0: i32) -> (i32, i32) {
    %c0_i32 = arith.constant 0 : i32
    %c0_i32_0 = arith.constant 0 : i32
    %c0_i32_1 = arith.constant 0 : i32
    return %c0_i32, %c0_i32_0 : i32, i32
  }
  func.func @transform_4(%arg0: i32) -> (i32, i32) {
    %c0_i32 = arith.constant 0 : i32
    %c0_i32_0 = arith.constant 0 : i32
    %c0_i32_1 = arith.constant 0 : i32
    return %c0_i32, %c0_i32_0 : i32, i32
  }
  func.func @transform_5(%arg0: i32) -> (i32, i32) {
    %c0_i32 = arith.constant 0 : i32
    %c0_i32_0 = arith.constant 0 : i32
    return %c0_i32, %arg0 : i32, i32
  }
}

</mosaic_0001>

<llo_original>
// kernel: tpu_custom_call.1
$region0: #{tpu_custom_call.1}
  #allocation0 [shape = 'u32[]', space=smem, size = 0x4, offset = 0x4, fixed_abs, tag = 'smem constant byte address 0x4 - core index']
  #allocation1 [shape = 'u32[72,128]{1,0:T(1,128)}', space=vmem, size = 0x9000, scoped, tag = 'internal scratch']
  #allocation2 [shape = 'f32[1,1]{1,0:T(1,128)S(6)}', space=smem, size = 0x200, scoped, tag = 'scoped memory for tpu_custom_call.1']
  %s0 = inlined_call_operand.vmem [shape: f32[2,4], index: 0, kind: input, shape index: {}]
  %s1 = inlined_call_operand.vmem [shape: f32[32,4], index: 1, kind: input, shape index: {}]
  %s2 = inlined_call_operand.vmem [shape: f32[32,1], index: 2, kind: input, shape index: {}]
  %s3 = inlined_call_operand.vmem [shape: f32[32,1], index: 3, kind: input, shape index: {}]
  %s4 = inlined_call_operand.<no memory space> [shape: f32[1,1], index: 4, kind: input, shape index: {}]
  %s5 = inlined_call_operand.hbm [shape: f32[1,2], index: 5, kind: output, shape index: {}]
  %s6 = sld [smem:[#allocation0]]
  $region30: #{tpu_custom_call.1} parent=0
    _
  %s8 = ssub.s32 1, %s6
  %s9 = scalar_select 0, %s8, %s6
  %10 = sst [smem:[#allocation2]] %s4
  $region1: #{tpu_custom_call.1} parent=0
    #allocation3 [shape = 'u8[512]{0}', space=vmem, size = 0x400, scoped, tag = 'output window, operand 0, single buffered']
    #allocation4 [shape = 's32[1]{0}', space=sflag, size = 0x4, scoped, tag = 'scoped memory for tpu_custom_call.1']
    %11 = vsyncpa [#allocation4], 0
    // Predicated region
    $region2: #{tpu_custom_call.1} parent=1 // pred_check
      _
    $region3: #{tpu_custom_call.1} parent=1 // pred_check_branch
      %13 = sbr.rel (0) target = $region5
    $region4: #{tpu_custom_call.1} parent=1 // pred_region
      _
    $region5: #{tpu_custom_call.1} parent=1 // pred_fallthru
      _
    // Predicated region
    $region6: #{tpu_custom_call.1} parent=1 // pred_check
      _
    $region7: #{tpu_custom_call.1} parent=1 // pred_check_branch
      %15 = sbr.rel (0) target = $region9
    $region8: #{tpu_custom_call.1} parent=1 // pred_region
      _
    $region9: #{tpu_custom_call.1} parent=1 // pred_fallthru
      _
    // Predicated region
    $region10: #{tpu_custom_call.1} parent=1 // pred_check
      _
    $region11: #{tpu_custom_call.1} parent=1 // pred_check_branch
      %17 = sbr.rel (0) target = $region13
    $region12: #{tpu_custom_call.1} parent=1 // pred_region
      _
    $region13: #{tpu_custom_call.1} parent=1 // pred_fallthru
      _
    // Predicated region
    $region14: #{tpu_custom_call.1} parent=1 // pred_check
      _
    $region15: #{tpu_custom_call.1} parent=1 // pred_check_branch
      %19 = sbr.rel (0) target = $region17
    $region16: #{tpu_custom_call.1} parent=1 // pred_region
      _
    $region17: #{tpu_custom_call.1} parent=1 // pred_fallthru
      _
    // Predicated region
    $region18: #{tpu_custom_call.1} parent=1 // pred_check
      _
    $region19: #{tpu_custom_call.1} parent=1 // pred_check_branch
      %21 = sbr.rel (0) target = $region21
    $region20: #{tpu_custom_call.1} parent=1 // pred_region
      _
    $region21: #{tpu_custom_call.1} parent=1 // pred_fallthru
      _
    %v22 = vld [vmem:[%s1] sm:$0xff]
    %v23 = vld [vmem:[%s1 + $0x8] sm:$0xff]
    %v24 = vld [vmem:[%s1 + $0x10] sm:$0xff]
    %v25 = vld [vmem:[%s1 + $0x18] sm:$0xff]
    %v26 = vld [vmem:[%s2] sm:$0xff]
    %v27 = vld [vmem:[%s2 + $0x8] sm:$0xff]
    %v28 = vld [vmem:[%s2 + $0x10] sm:$0xff]
    %v29 = vld [vmem:[%s2 + $0x18] sm:$0xff]
    %v30 = vld [vmem:[%s3] sm:$0xff]
    %v31 = vld [vmem:[%s3 + $0x8] sm:$0xff]
    %v32 = vld [vmem:[%s3 + $0x10] sm:$0xff]
    %v33 = vld [vmem:[%s3 + $0x18] sm:$0xff]
    %s34 = sld [smem:[#allocation2]]
    %v35 = vld [vmem:[%s0] sm:$0x3]
    %37 = vset.pattern.permute.xlu0 0
    %38 = vperm.xlu0 %37, %v26
    %v39 = vpop.permute.xlu0 %38
    %42 = vset.pattern.permute.xlu0 0
    %43 = vperm.xlu0 %42, %v27
    %v44 = vpop.permute.xlu0 %43
    %47 = vset.pattern.permute.xlu0 0
    %48 = vperm.xlu0 %47, %v28
    %v49 = vpop.permute.xlu0 %48
    %52 = vset.pattern.permute.xlu0 0
    %53 = vperm.xlu0 %52, %v29
    %v54 = vpop.permute.xlu0 %53
    %vm56 = vcmask 31744
    %v58 = vsel %vm56, %v22, 0
    %v61 = vsel %vm56, %v23, 0
    %v64 = vsel %vm56, %v24, 0
    %v67 = vsel %vm56, %v25, 0
    %v70 = vsel %vm56, %v35, 0
    %72 = vmatpush.xpose.msra.mxu0 0.0
    %73 = vmatpush.xpose.msra.mxu0 0.0
    %74 = vmatpush.xpose.msra.mxu0 0.0
    %75 = vmatpush.xpose.msra.mxu0 0.0
    %76 = vmatpush.xpose.msra.mxu0 0.0
    %77 = vmatpush.xpose.msra.mxu0 0.0
    %78 = vmatpush.xpose.msra.mxu0 0.0
    %79 = vmatpush.xpose.msra.mxu0 0.0
    %80 = vmatpush.xpose.msra.mxu0 0.0
    %81 = vmatpush.xpose.msra.mxu0 0.0
    %82 = vmatpush.xpose.msra.mxu0 0.0
    %83 = vmatpush.xpose.msra.mxu0 0.0
    %84 = vmatpush.xpose.msra.mxu0 0.0
    %85 = vmatpush.xpose.msra.mxu0 0.0
    %86 = vmatpush.xpose.msra.mxu0 0.0
    %87 = vmatpush.xpose.msra.mxu0 %v70
    %88 = vmatmul.f32.gmra.mxu0 %v58
    %v89 = vpop.f32.mrf.mxu0
    %v90 = vadd.f32 %v39, %v89
    %91 = vmatmul.f32.gmra.mxu0 %v61
    %v92 = vpop.f32.mrf.mxu0
    %v93 = vadd.f32 %v44, %v92
    %94 = vmatmul.f32.gmra.mxu0 %v64
    %v95 = vpop.f32.mrf.mxu0
    %v96 = vadd.f32 %v49, %v95
    %97 = vmatmul.f32.gmra.mxu0 %v67
    %v98 = vpop.f32.mrf.mxu0
    %v99 = vadd.f32 %v54, %v98
    %100 = vdwg.mxu0
    %v101 = vmax.f32 %v90, 0.0
    %v102 = vmax.f32 %v93, 0.0
    %v103 = vmax.f32 %v96, 0.0
    %v104 = vmax.f32 %v99, 0.0
    %106 = vset.pattern.permute.xlu0 0
    %107 = vperm.xlu0 %106, %v30
    %v108 = vpop.permute.xlu0 %107
    %111 = vset.pattern.permute.xlu0 0
    %112 = vperm.xlu0 %111, %v31
    %v113 = vpop.permute.xlu0 %112
    %116 = vset.pattern.permute.xlu0 0
    %117 = vperm.xlu0 %116, %v32
    %v118 = vpop.permute.xlu0 %117
    %121 = vset.pattern.permute.xlu0 0
    %122 = vperm.xlu0 %121, %v33
    %v123 = vpop.permute.xlu0 %122
    %v125 = vmul.f32 %v101, %v108
    %v126 = vmul.f32 %v102, %v113
    %v127 = vmul.f32 %v103, %v118
    %v128 = vmul.f32 %v104, %v123
    %vm129 = vcmask 15360
    %v130 = vsel %vm129, %v125, 0.0
    %v131 = vsel %vm129, %v126, 0.0
    %v132 = vadd.f32 %v130, %v131
    %v133 = vsel %vm129, %v127, 0.0
    %v134 = vadd.f32 %v132, %v133
    %v135 = vsel %vm129, %v128, 0.0
    %v136 = vadd.f32 %v134, %v135
    %v137 = vrot.slane %v136, 4
    %v138 = vadd.f32 %v136, %v137
    %v139 = vrot.slane %v138, 2
    %v140 = vadd.f32 %v138, %v139
    %v141 = vrot.slane %v140, 1
    %v142 = vadd.f32 %v140, %v141
    %v143 = vstv %s34
    %v144 = vadd.f32 %v142, %v143
    %vm145 = vcmask 8192
    %146 = vst.msk [vmem:[#allocation3] sm:$0x1] %vm145, %v144
    // Predicated region
    $region22: #{tpu_custom_call.1} parent=1 // pred_check
      _
    $region23: #{tpu_custom_call.1} parent=1 // pred_check_branch
      %148 = sbr.rel (0) target = $region25
    $region24: #{tpu_custom_call.1} parent=1 // pred_region
      %150 = vsyncadd [#allocation4], 0
      %s152 = sshll.u32 [#allocation3], 4
      %s153 = int_to_ptr.vmem [resolvable:$true] %s152
      %s154 = sshll.u32 %s5, 4
      %s155 = int_to_ptr.hbm [resolvable:$true] %s154
      %157 = dma.vmem_to_hbm [thread:$0]  %s153, 16, %s155, [#allocation4]
    $region25: #{tpu_custom_call.1} parent=1 // pred_fallthru
      _
    // Predicated region
    $region26: #{tpu_custom_call.1} parent=1 // pred_check
      _
    $region27: #{tpu_custom_call.1} parent=1 // pred_check_branch
      %159 = sbr.rel (0) target = $region29
    $region28: #{tpu_custom_call.1} parent=1 // pred_region
      %161 = dma.done [#allocation4], 16
    $region29: #{tpu_custom_call.1} parent=1 // pred_fallthru
      _
    %162 = vsyncpa [#allocation4], 1

</llo_original>
